<compile_context>
chip_gen: v5e
topology: v5e:2x2
jax: 0.10.0
libtpu: 0.0.40
codegen_flags: <defaults>
</compile_context>

<pallas_src>
import functools

import jax
import jax.numpy as jnp
from jax.experimental import pallas as pl
from jax.experimental.pallas import tpu as pltpu


def _ce_rows_kernel(logits_ref, labels_ref, weights_ref, loss_ref, *, n_rows):
    """Per-tile weighted CE: writes per-row loss (TILE_M, 1) for this tile."""
    i = pl.program_id(0)

    logits = logits_ref[...].astype(jnp.float32)   # (tm, C) cast after VMEM load
    labels = labels_ref[...]                       # (tm, 1) int32
    w = weights_ref[...].astype(jnp.float32)       # (1, C)

    tm, c = logits.shape

    # one-hot(labels) via a column iota; reused for both gather and alpha
    col_ids = jax.lax.broadcasted_iota(jnp.int32, (tm, c), 1)
    sel = (col_ids == labels).astype(jnp.float32)                      # (tm, C)

    # numerically stable logsumexp (f32 exp/log on all generations)
    m = jnp.max(logits, axis=1, keepdims=True)                          # (tm, 1)
    lse = m + jnp.log(jnp.sum(jnp.exp(logits - m), axis=1, keepdims=True))

    # logits.gather(-1, labels) and alpha = weights[labels]
    gathered = jnp.sum(sel * logits, axis=1, keepdims=True)             # (tm, 1)
    alpha = jnp.sum(sel * w, axis=1, keepdims=True)   # (1,C) broadcasts implicitly

    loss = alpha * (lse - gathered)                                     # (tm, 1)

    # mask padded tail rows of the last tile (defensive; OOB rows are also
    # dropped by the partial-block write-back)
    row_ids = i * tm + jax.lax.broadcasted_iota(jnp.int32, (tm, 1), 0)
    loss_ref[...] = jnp.where(row_ids < n_rows, loss, 0.0)


def _choose_tile_m(m, c, itemsize):
    """Pick a TILE_M that keeps a double-buffered logits tile small enough for
    every TPU generation (v7x has only 64 MiB physical VMEM)."""
    budget_bytes = 2 * 1024 * 1024          # per logits tile (x2 for double buffer)
    tm = budget_bytes // max(1, c * itemsize)
    tm = max(8, min(tm, 1024))
    tm = (tm // 8) * 8                      # sublane-aligned
    if m < tm:
        return m                            # full-dim block is always legal
    return tm


def cross_entropy_pallas(logits, labels, class_weights, *, tile_m=None):
    """logits: (M, C) any float dtype, labels: (M,) int, class_weights: (C,)."""
    M, C = logits.shape
    labels2d = labels.astype(jnp.int32).reshape(M, 1)
    weights2d = class_weights.astype(jnp.float32).reshape(1, C)

    if tile_m is None:
        tile_m = _choose_tile_m(M, C, jnp.dtype(logits.dtype).itemsize)
    tile_m = min(tile_m, M)
    grid = (pl.cdiv(M, tile_m),)

    kernel = functools.partial(_ce_rows_kernel, n_rows=M)

    per_row = pl.pallas_call(
        kernel,
        out_shape=jax.ShapeDtypeStruct((M, 1), jnp.float32),
        grid_spec=pltpu.PrefetchScalarGridSpec(
            num_scalar_prefetch=0,
            grid=grid,
            in_specs=[
                pl.BlockSpec((tile_m, C), lambda i: (i, 0)),   # logits (native dtype)
                pl.BlockSpec((tile_m, 1), lambda i: (i, 0)),   # labels
                pl.BlockSpec((1, C), lambda i: (0, 0)),        # class weights
            ],
            out_specs=pl.BlockSpec((tile_m, 1), lambda i: (i, 0)),
        ),
        compiler_params=pltpu.CompilerParams(
            dimension_semantics=("parallel",),          # no cross-tile dependence
            vmem_limit_bytes=32 * 1024 * 1024,
        ),
    )(logits, labels2d, weights2d)

    # Module semantics: loss.mean() over the M rows (multiply by 1/M, no divide).
    # TODO(synk): for vocab-scale C add a second "arbitrary" grid axis over C
    # with an online logsumexp; for C << 128 a lane-transposed layout would
    # improve lane utilization further.
    return jnp.sum(per_row) * (1.0 / M)


def cross_entropy_ref(logits, labels, class_weights):
    """Pure-JAX reference mirroring the torch forward."""
    logits = logits.astype(jnp.float32)
    m = jnp.max(logits, axis=1, keepdims=True)
    lse = m + jnp.log(jnp.sum(jnp.exp(logits - m), axis=1, keepdims=True))
    gathered = jnp.take_along_axis(logits, labels.reshape(-1, 1), axis=1)
    alpha = class_weights.astype(jnp.float32)[labels].reshape(-1, 1)
    return jnp.mean(alpha * (-gathered + lse))


if __name__ == "__main__":
    key = jax.random.PRNGKey(0)
    k1, k2, k3, k4 = jax.random.split(key, 4)

    # 1) Shape from the module docstring: M predictions, C = 2 classes.
    M, C = 8, 2
    logits = jax.random.normal(k1, (M, C), dtype=jnp.float32)
    labels = jax.random.randint(k2, (M,), 0, C, dtype=jnp.int32)
    class_weights = jnp.array([1.0, 2.0], dtype=jnp.float32)

    out = cross_entropy_pallas(logits, labels, class_weights)
    jax.block_until_ready(out)
    ref = cross_entropy_ref(logits, labels, class_weights)
    assert jnp.allclose(out, ref, rtol=1e-5, atol=1e-5), (out, ref)

    # 2) Larger bf16 case exercising the tiled path + tail masking (M % tile != 0).
    M2, C2 = 1000, 128
    logits2 = jax.random.normal(k3, (M2, C2), dtype=jnp.bfloat16)
    labels2 = jax.random.randint(k4, (M2,), 0, C2, dtype=jnp.int32)
    weights2 = jnp.linspace(0.5, 2.0, C2, dtype=jnp.float32)

    out2 = cross_entropy_pallas(logits2, labels2, weights2, tile_m=256)
    jax.block_until_ready(out2)
    ref2 = cross_entropy_ref(logits2, labels2, weights2)
    assert jnp.allclose(out2, ref2, rtol=1e-4, atol=1e-5), (out2, ref2)

    print("KERNEL_OK")
</pallas_src>

<mosaic_0001>
module attributes {stable_mosaic.version = 11 : i64} {
  func.func @_ce_rows_kernel(%arg0: i32, %arg1: memref<8x2xf32, #tpu.memory_space<vmem>>, %arg2: memref<8x1xi32, #tpu.memory_space<vmem>>, %arg3: memref<1x2xf32, #tpu.memory_space<vmem>>, %arg4: memref<8x1xf32, #tpu.memory_space<vmem>>) attributes {dimension_semantics = [#tpu.dimension_semantics<parallel>], iteration_bounds = array<i64: 1>, scalar_prefetch = 0 : i64, scratch_operands = 0 : i64, tpu.core_type = #tpu.core_type<tc>, window_params = [{transform_indices = @transform_0, window_bounds = array<i64: 8, 2>}, {transform_indices = @transform_1, window_bounds = array<i64: 8, 1>}, {pipeline_mode = #tpu.pipeline_mode<synchronous>, transform_indices = @transform_2, window_bounds = array<i64: 1, 2>}, {transform_indices = @transform_3, window_bounds = array<i64: 8, 1>}]} {
    %c0 = arith.constant 0 : index
    %c0_0 = arith.constant 0 : index
    %0 = vector.load %arg1[%c0, %c0_0] : memref<8x2xf32, #tpu.memory_space<vmem>>, vector<8x2xf32>
    %c0_1 = arith.constant 0 : index
    %c0_2 = arith.constant 0 : index
    %1 = vector.load %arg2[%c0_1, %c0_2] : memref<8x1xi32, #tpu.memory_space<vmem>>, vector<8x1xi32>
    %c0_3 = arith.constant 0 : index
    %c0_4 = arith.constant 0 : index
    %2 = vector.load %arg3[%c0_3, %c0_4] : memref<1x2xf32, #tpu.memory_space<vmem>>, vector<1x2xf32>
    %3 = tpu.iota {dimensions = array<i32: 1>} : vector<8x2xi32>
    %4 = vector.broadcast %1 : vector<8x1xi32> to vector<8x2xi32>
    %5 = arith.cmpi eq, %3, %4 : vector<8x2xi32>
    %6 = arith.extui %5 : vector<8x2xi1> to vector<8x2xi32>
    %7 = arith.sitofp %6 : vector<8x2xi32> to vector<8x2xf32>
    %cst = arith.constant dense<0xFF800000> : vector<8xf32>
    %8 = vector.multi_reduction <maximumf>, %0, %cst [1] : vector<8x2xf32> to vector<8xf32>
    %9 = vector.shape_cast %8 : vector<8xf32> to vector<8x1xf32>
    %10 = vector.broadcast %9 : vector<8x1xf32> to vector<8x2xf32>
    %11 = arith.subf %0, %10 : vector<8x2xf32>
    %12 = math.exp %11 : vector<8x2xf32>
    %cst_5 = arith.constant dense<0.000000e+00> : vector<8xf32>
    %13 = vector.multi_reduction <add>, %12, %cst_5 [1] : vector<8x2xf32> to vector<8xf32>
    %14 = vector.shape_cast %13 : vector<8xf32> to vector<8x1xf32>
    %15 = math.log %14 : vector<8x1xf32>
    %16 = arith.addf %9, %15 : vector<8x1xf32>
    %17 = arith.mulf %7, %0 : vector<8x2xf32>
    %cst_6 = arith.constant dense<0.000000e+00> : vector<8xf32>
    %18 = vector.multi_reduction <add>, %17, %cst_6 [1] : vector<8x2xf32> to vector<8xf32>
    %19 = vector.shape_cast %18 : vector<8xf32> to vector<8x1xf32>
    %20 = vector.broadcast %2 : vector<1x2xf32> to vector<8x2xf32>
    %21 = arith.mulf %7, %20 : vector<8x2xf32>
    %cst_7 = arith.constant dense<0.000000e+00> : vector<8xf32>
    %22 = vector.multi_reduction <add>, %21, %cst_7 [1] : vector<8x2xf32> to vector<8xf32>
    %23 = vector.shape_cast %22 : vector<8xf32> to vector<8x1xf32>
    %24 = arith.subf %16, %19 : vector<8x1xf32>
    %25 = arith.mulf %23, %24 : vector<8x1xf32>
    %c8_i32 = arith.constant 8 : i32
    %26 = arith.muli %arg0, %c8_i32 : i32
    %27 = tpu.iota {dimensions = array<i32: 0>} : vector<8x1xi32>
    %28 = vector.broadcast %26 : i32 to vector<8x1xi32>
    %29 = arith.addi %28, %27 : vector<8x1xi32>
    %c8_i32_8 = arith.constant 8 : i32
    %30 = vector.broadcast %c8_i32_8 : i32 to vector<8x1xi32>
    %31 = arith.cmpi slt, %29, %30 : vector<8x1xi32>
    %cst_9 = arith.constant 0.000000e+00 : f32
    %32 = vector.broadcast %cst_9 : f32 to vector<8x1xf32>
    %33 = arith.select %31, %25, %32 : vector<8x1xi1>, vector<8x1xf32>
    %c0_10 = arith.constant 0 : index
    %c0_11 = arith.constant 0 : index
    %34 = vector.load %arg4[%c0_10, %c0_11] : memref<8x1xf32, #tpu.memory_space<vmem>>, vector<8x1xf32>
    tpu.vector_store %arg4[%c0_10, %c0_11], %33 {strides = array<i32>} : memref<8x1xf32, #tpu.memory_space<vmem>>, vector<8x1xf32>,
    return
  }
  func.func @transform_0(%arg0: i32) -> (i32, i32) {
    %c0_i32 = arith.constant 0 : i32
    %c0_i32_0 = arith.constant 0 : i32
    return %arg0, %c0_i32 : i32, i32
  }
  func.func @transform_1(%arg0: i32) -> (i32, i32) {
    %c0_i32 = arith.constant 0 : i32
    %c0_i32_0 = arith.constant 0 : i32
    return %arg0, %c0_i32 : i32, i32
  }
  func.func @transform_2(%arg0: i32) -> (i32, i32) {
    %c0_i32 = arith.constant 0 : i32
    %c0_i32_0 = arith.constant 0 : i32
    %c0_i32_1 = arith.constant 0 : i32
    return %c0_i32, %c0_i32_0 : i32, i32
  }
  func.func @transform_3(%arg0: i32) -> (i32, i32) {
    %c0_i32 = arith.constant 0 : i32
    %c0_i32_0 = arith.constant 0 : i32
    return %arg0, %c0_i32 : i32, i32
  }
}

</mosaic_0001>

<llo_original>
// kernel: tpu_custom_call.1
$region0: #{tpu_custom_call.1}
  #allocation0 [shape = 'u32[]', space=smem, size = 0x4, offset = 0x4, fixed_abs, tag = 'smem constant byte address 0x4 - core index']
  #allocation1 [shape = 'u32[72,128]{1,0:T(1,128)}', space=vmem, size = 0x9000, scoped, tag = 'internal scratch']
  %s0 = inlined_call_operand.vmem [shape: f32[8,2], index: 0, kind: input, shape index: {}]
  %s1 = inlined_call_operand.vmem [shape: s32[8,1], index: 1, kind: input, shape index: {}]
  %s2 = inlined_call_operand.vmem [shape: f32[1,2], index: 2, kind: input, shape index: {}]
  %s3 = inlined_call_operand.vmem [shape: f32[8,1], index: 3, kind: output, shape index: {}]
  %s4 = sld [smem:[#allocation0]]
  $region22: #{tpu_custom_call.1} parent=0
    _
  %s6 = ssub.s32 1, %s4
  %s7 = scalar_select 0, %s6, %s4
  // Predicated region
  $region2: #{tpu_custom_call.1} parent=0 // pred_check
    _
  $region3: #{tpu_custom_call.1} parent=0 // pred_check_branch
    %9 = sbr.rel (0) target = $region5
  $region4: #{tpu_custom_call.1} parent=0 // pred_region
    _
  $region5: #{tpu_custom_call.1} parent=0 // pred_fallthru
    _
  // Predicated region
  $region6: #{tpu_custom_call.1} parent=0 // pred_check
    _
  $region7: #{tpu_custom_call.1} parent=0 // pred_check_branch
    %11 = sbr.rel (0) target = $region9
  $region8: #{tpu_custom_call.1} parent=0 // pred_region
    _
  $region9: #{tpu_custom_call.1} parent=0 // pred_fallthru
    _
  // Predicated region
  $region10: #{tpu_custom_call.1} parent=0 // pred_check
    _
  $region11: #{tpu_custom_call.1} parent=0 // pred_check_branch
    %13 = sbr.rel (0) target = $region13
  $region12: #{tpu_custom_call.1} parent=0 // pred_region
    _
  $region13: #{tpu_custom_call.1} parent=0 // pred_fallthru
    _
  %v14 = vld [vmem:[%s0] sm:$0xff]
  %v15 = vld [vmem:[%s1] sm:$0xff]
  %v16 = vld [vmem:[%s2] sm:$0x1]
  %v17 = vlaneseq
  %v18 = vand.u32 %v17, 127
  %19 = vset.pattern.permute.xlu0 0
  %20 = vperm.xlu0 %19, %v15
  %v21 = vpop.permute.xlu0 %20
  %vm22 = vcmp.eq.s32.totalorder %v18, %v21
  %v23 = vsel %vm22, 1, 0
  %v24 = vcvt.s32.f32 %v23
  %vm25 = vcmask 15360
  %v26 = vsel %vm25, %v14, -inf
  %27 = vmax.xlane.f32.xlu0 %v26
  %v28 = vpop.xlane.xlu0 %27
  %v29 = vsub.f32 %v14, %v28
  %v30 = vmul.f32 %v29, 1.442695
  %v31 = vpow.pop %v30
  %v32 = vsel %vm25, %v31, 0.0
  %33 = vadd.xlane.f32.xlu0 %v32
  %v34 = vpop.xlane.xlu0 %33
  %v35 = vlog2.pop %v34
  %v36 = vmul.f32 %v35, 0.6931472
  %v37 = vadd.f32 %v28, %v36
  %v38 = vmul.f32 %v24, %v14
  %v39 = vsel %vm25, %v38, 0.0
  %40 = vadd.xlane.f32.xlu0 %v39
  %v41 = vpop.xlane.xlu0 %40
  %v43 = vperm.slane %v16, 0
  %v45 = vmul.f32 %v24, %v43
  %v46 = vsel %vm25, %v45, 0.0
  %47 = vadd.xlane.f32.xlu0 %v46
  %v48 = vpop.xlane.xlu0 %47
  %v49 = vsub.f32 %v37, %v41
  %v50 = vmul.f32 %v48, %v49
  %s51 = smul.u32 0, 8
  %v52 = vlaneseq
  %v53 = vshrl.u32 %v52, 7
  %v54 = vstv %s51
  %v55 = vadd.s32 %v54, %v53
  %vm56 = vcmp.lt.s32.totalorder %v55, 8
  %v57 = vsel %vm56, %v50, 0.0
  %vm58 = vcmask 7168
  %59 = vst.msk [vmem:[%s3] sm:$0xff] %vm58, %v57
  // Predicated region
  $region14: #{tpu_custom_call.1} parent=0 // pred_check
    _
  $region15: #{tpu_custom_call.1} parent=0 // pred_check_branch
    %61 = sbr.rel (0) target = $region17
  $region16: #{tpu_custom_call.1} parent=0 // pred_region
    _
  $region17: #{tpu_custom_call.1} parent=0 // pred_fallthru
    _
  // Predicated region
  $region18: #{tpu_custom_call.1} parent=0 // pred_check
    _
  $region19: #{tpu_custom_call.1} parent=0 // pred_check_branch
    %63 = sbr.rel (0) target = $region21
  $region20: #{tpu_custom_call.1} parent=0 // pred_region
    _
  $region21: #{tpu_custom_call.1} parent=0 // pred_fallthru
    _

</llo_original>
